<compile_context>
chip_gen: v7x
topology: tpu7x:2x2x1
jax: 0.10.0
libtpu: 0.0.40
codegen_flags: <defaults>
</compile_context>

<pallas_src>
import jax
import jax.numpy as jnp
from jax.experimental import pallas as pl
from jax.experimental.pallas import tpu as pltpu


def meta_embedding_kernel(hal_ref, x_ref, cent_ref, w_ref, out_ref, sel_ref):
    """One grid step handles one (spatial tile, batch element) pair.

    Ref shapes (per block):
      hal_ref  : (B, D)     softmax(domain_code), SMEM scalars
      x_ref    : (1, C, tS) this batch element's features (native layout)
      cent_ref : (D, C, tS) centroid tile (all domains)
      w_ref    : (C, C)     selector 1x1-conv weight, (C_out, C_in)
      out_ref  : (1, C, tS)
      sel_ref  : (1, C, tS)
    """
    b = pl.program_id(1)

    x = x_ref[0]                                                   # (C, tS)

    # ---- selector: 1x1 conv in native layout == (C_out,C_in) @ (C_in,tS) ----
    sel = jnp.tanh(jnp.dot(w_ref[...], x,
                           preferred_element_type=jnp.float32))    # (C, tS) f32

    # ---- memory_feature = sum_d hal[b, d] * centroids[d] ----
    # SMEM scalar weights broadcast into VPU multiplies; D is tiny & static.
    # TODO(synk): if num_domain grows large (>~8), switch this unrolled VPU
    # chain to a single (1,D)@(D, C*tS) MXU contraction.
    num_domain = cent_ref.shape[0]
    mem = hal_ref[b, 0] * cent_ref[0]                              # (C, tS) f32
    for d in range(1, num_domain):                                 # static unroll
        mem = mem + hal_ref[b, d] * cent_ref[d]

    # ---- fuse: out = direct_feature + memory_feature * sel_scale ----
    out_ref[0] = (x + mem * sel).astype(out_ref.dtype)
    sel_ref[0] = sel.astype(sel_ref.dtype)


def _pick_spatial_tile(S, C, D, dtype_bytes=4, budget_bytes=24 * 1024 * 1024):
    """Largest spatial tile (multiple of 128, dividing S) fitting the budget."""
    per_ts = 2 * dtype_bytes * C * (D + 3)     # cent + x + out + sel, 2x buffered
    max_ts = budget_bytes // max(per_ts, 1)
    if S <= max_ts or S % 128 != 0:
        return S                                # whole axis (or untileable) block
    ts = min((max_ts // 128) * 128, S)
    while ts >= 128 and S % ts != 0:
        ts -= 128
    return ts if ts >= 128 else S


@jax.jit
def meta_embedding_forward(x_nchw, domain_code, centroids_nchw, w_sel):
    """x_nchw: (B, C, H, W), domain_code: (B, D), centroids_nchw: (D, C, H, W),
    w_sel: (C_out, C_in, 1, 1) selector 1x1-conv weight (no bias).

    Returns (out_nchw, hal_scale, sel_scale_nchw) matching the PyTorch module.
    """
    B, C, H, W = x_nchw.shape
    D = centroids_nchw.shape[0]
    S = H * W

    # Free contiguous reshapes only — no layout transposes, no extra HBM traffic.
    x = x_nchw.reshape(B, C, S)
    cent = centroids_nchw.reshape(D, C, S)
    w = w_sel[:, :, 0, 0]                                          # (C_out, C_in)

    # Tiny (B, D) softmax computed once here; returned directly and fed to the
    # kernel as SMEM scalars.
    hal = jax.nn.softmax(domain_code.astype(jnp.float32), axis=-1)

    tS = _pick_spatial_tile(S, C, D)
    num_s = S // tS

    # Explicit VMEM budget: double-buffered cent/x/out/sel tiles + weight + slack.
    vmem_bytes = 2 * 4 * (D * C * tS + 3 * C * tS + C * C) + (2 << 20)
    vmem_bytes = int(min(max(vmem_bytes, 4 << 20), 48 << 20))

    grid_spec = pltpu.PrefetchScalarGridSpec(
        num_scalar_prefetch=0,
        # Batch innermost: the centroid tile's block index does not change
        # across the inner loop, so it is not re-DMA'd per batch element.
        grid=(num_s, B),
        in_specs=[
            pl.BlockSpec(memory_space=pltpu.MemorySpace.SMEM),      # hal (B, D)
            pl.BlockSpec((1, C, tS), lambda s, b: (b, 0, s)),       # x
            pl.BlockSpec((D, C, tS), lambda s, b: (0, 0, s)),       # centroids
            pl.BlockSpec((C, C), lambda s, b: (0, 0)),              # selector w
        ],
        out_specs=[
            pl.BlockSpec((1, C, tS), lambda s, b: (b, 0, s)),       # out
            pl.BlockSpec((1, C, tS), lambda s, b: (b, 0, s)),       # sel_scale
        ],
    )

    out, sel = pl.pallas_call(
        meta_embedding_kernel,
        out_shape=(
            jax.ShapeDtypeStruct((B, C, S), x.dtype),
            jax.ShapeDtypeStruct((B, C, S), x.dtype),
        ),
        grid_spec=grid_spec,
        compiler_params=pltpu.CompilerParams(
            dimension_semantics=("parallel", "parallel"),
            vmem_limit_bytes=vmem_bytes),
    )(hal, x, cent, w)

    return out.reshape(B, C, H, W), hal, sel.reshape(B, C, H, W)


def reference_forward(x_nchw, domain_code, centroids_nchw, w_sel):
    """Pure-JAX reference mirroring the PyTorch forward exactly."""
    hal = jax.nn.softmax(domain_code, axis=-1)
    D = centroids_nchw.shape[0]
    cent_flat = centroids_nchw.reshape(D, -1)
    mem = (hal @ cent_flat).reshape(x_nchw.shape)
    sel = jnp.tanh(jnp.einsum('oc,bchw->bohw', w_sel[:, :, 0, 0], x_nchw))
    out = x_nchw + mem * sel
    return out, hal, sel


if __name__ == "__main__":
    # Small, module-consistent shapes. H*W = 256 keeps the spatial axis
    # lane-dense (multiple of 128).
    B, feat_dim, H, W = 2, 32, 16, 16
    num_domain = 3

    key = jax.random.PRNGKey(0)
    k_x, k_dc, k_cent, k_w = jax.random.split(key, 4)

    x = jax.random.normal(k_x, (B, feat_dim, H, W), dtype=jnp.float32)
    domain_code = jax.random.normal(k_dc, (B, num_domain), dtype=jnp.float32)
    centroids = jax.random.normal(k_cent, (num_domain, feat_dim, H, W),
                                  dtype=jnp.float32)

    # Selector Conv2d(feat_dim, feat_dim, 1, bias=False): kaiming-uniform-style
    # init (bound = 1/sqrt(fan_in)), as in PyTorch defaults.
    bound = 1.0 / jnp.sqrt(jnp.float32(feat_dim))
    w_sel = jax.random.uniform(k_w, (feat_dim, feat_dim, 1, 1),
                               minval=-bound, maxval=bound, dtype=jnp.float32)
    # NOTE: the `hallucinator` branch of the module is constructed in __init__
    # but never used in forward(), so it is intentionally not implemented.

    out, hal, sel = meta_embedding_forward(x, domain_code, centroids, w_sel)
    jax.block_until_ready((out, hal, sel))

    ref_out, ref_hal, ref_sel = reference_forward(x, domain_code, centroids, w_sel)
    assert jnp.allclose(out, ref_out, atol=1e-4, rtol=1e-4)
    assert jnp.allclose(hal, ref_hal, atol=1e-5, rtol=1e-5)
    assert jnp.allclose(sel, ref_sel, atol=1e-4, rtol=1e-4)

    print("KERNEL_OK")
</pallas_src>

<mosaic_0001>
module attributes {stable_mosaic.version = 11 : i64} {
  func.func @meta_embedding_kernel(%arg0: i32, %arg1: i32, %arg2: memref<2x3xf32, #tpu.memory_space<smem>>, %arg3: memref<1x32x256xf32, #tpu.memory_space<vmem>>, %arg4: memref<3x32x256xf32, #tpu.memory_space<vmem>>, %arg5: memref<32x32xf32, #tpu.memory_space<vmem>>, %arg6: memref<1x32x256xf32, #tpu.memory_space<vmem>>, %arg7: memref<1x32x256xf32, #tpu.memory_space<vmem>>) attributes {dimension_semantics = [#tpu.dimension_semantics<parallel>, #tpu.dimension_semantics<parallel>], iteration_bounds = array<i64: 1, 2>, scalar_prefetch = 0 : i64, scratch_operands = 0 : i64, tpu.core_type = #tpu.core_type<tc>, window_params = [{transform_indices = @transform_0, window_bounds = array<i64: 2, 3>}, {transform_indices = @transform_1, window_bounds = array<i64: 1, 32, 256>}, {transform_indices = @transform_2, window_bounds = array<i64: 3, 32, 256>}, {pipeline_mode = #tpu.pipeline_mode<synchronous>, transform_indices = @transform_3, window_bounds = array<i64: 32, 32>}, {transform_indices = @transform_4, window_bounds = array<i64: 1, 32, 256>}, {transform_indices = @transform_5, window_bounds = array<i64: 1, 32, 256>}]} {
    %c0 = arith.constant 0 : index
    %c0_0 = arith.constant 0 : index
    %c0_1 = arith.constant 0 : index
    %0 = vector.load %arg3[%c0, %c0_0, %c0_1] : memref<1x32x256xf32, #tpu.memory_space<vmem>>, vector<1x32x256xf32>
    %1 = vector.shape_cast %0 : vector<1x32x256xf32> to vector<32x256xf32>
    %c0_2 = arith.constant 0 : index
    %c0_3 = arith.constant 0 : index
    %2 = vector.load %arg5[%c0_2, %c0_3] : memref<32x32xf32, #tpu.memory_space<vmem>>, vector<32x32xf32>
    %cst = arith.constant dense<0.000000e+00> : vector<32x256xf32>
    %3 = tpu.matmul %2, %1, %cst {dimension_numbers = #tpu.dot_dimension_numbers<[1], [0], [0], [1], [0, 0, 1, 1], [], []>} : vector<32x32xf32>, vector<32x256xf32>, vector<32x256xf32> -> vector<32x256xf32>
    %4 = math.tanh %3 : vector<32x256xf32>
    %5 = arith.index_cast %arg1 : i32 to index
    %c0_4 = arith.constant 0 : index
    %6 = memref.load %arg2[%5, %c0_4] : memref<2x3xf32, #tpu.memory_space<smem>>
    %c0_5 = arith.constant 0 : index
    %c0_6 = arith.constant 0 : index
    %c0_7 = arith.constant 0 : index
    %7 = vector.load %arg4[%c0_5, %c0_6, %c0_7] : memref<3x32x256xf32, #tpu.memory_space<vmem>>, vector<1x32x256xf32>
    %8 = vector.shape_cast %7 : vector<1x32x256xf32> to vector<32x256xf32>
    %9 = vector.broadcast %6 : f32 to vector<32x256xf32>
    %10 = arith.mulf %9, %8 : vector<32x256xf32>
    %11 = arith.index_cast %arg1 : i32 to index
    %c1 = arith.constant 1 : index
    %12 = memref.load %arg2[%11, %c1] : memref<2x3xf32, #tpu.memory_space<smem>>
    %c1_8 = arith.constant 1 : index
    %c0_9 = arith.constant 0 : index
    %c0_10 = arith.constant 0 : index
    %13 = vector.load %arg4[%c1_8, %c0_9, %c0_10] : memref<3x32x256xf32, #tpu.memory_space<vmem>>, vector<1x32x256xf32>
    %14 = vector.shape_cast %13 : vector<1x32x256xf32> to vector<32x256xf32>
    %15 = vector.broadcast %12 : f32 to vector<32x256xf32>
    %16 = arith.mulf %15, %14 : vector<32x256xf32>
    %17 = arith.addf %10, %16 : vector<32x256xf32>
    %18 = arith.index_cast %arg1 : i32 to index
    %c2 = arith.constant 2 : index
    %19 = memref.load %arg2[%18, %c2] : memref<2x3xf32, #tpu.memory_space<smem>>
    %c2_11 = arith.constant 2 : index
    %c0_12 = arith.constant 0 : index
    %c0_13 = arith.constant 0 : index
    %20 = vector.load %arg4[%c2_11, %c0_12, %c0_13] : memref<3x32x256xf32, #tpu.memory_space<vmem>>, vector<1x32x256xf32>
    %21 = vector.shape_cast %20 : vector<1x32x256xf32> to vector<32x256xf32>
    %22 = vector.broadcast %19 : f32 to vector<32x256xf32>
    %23 = arith.mulf %22, %21 : vector<32x256xf32>
    %24 = arith.addf %17, %23 : vector<32x256xf32>
    %25 = arith.mulf %24, %4 : vector<32x256xf32>
    %26 = arith.addf %1, %25 : vector<32x256xf32>
    %c0_14 = arith.constant 0 : index
    %c0_15 = arith.constant 0 : index
    %c0_16 = arith.constant 0 : index
    %27 = vector.load %arg6[%c0_14, %c0_15, %c0_16] : memref<1x32x256xf32, #tpu.memory_space<vmem>>, vector<1x32x256xf32>
    %28 = vector.shape_cast %27 : vector<1x32x256xf32> to vector<32x256xf32>
    %29 = vector.shape_cast %26 : vector<32x256xf32> to vector<1x32x256xf32>
    tpu.vector_store %arg6[%c0_14, %c0_15, %c0_16], %29 {strides = array<i32>} : memref<1x32x256xf32, #tpu.memory_space<vmem>>, vector<1x32x256xf32>,
    %c0_17 = arith.constant 0 : index
    %c0_18 = arith.constant 0 : index
    %c0_19 = arith.constant 0 : index
    %30 = vector.load %arg7[%c0_17, %c0_18, %c0_19] : memref<1x32x256xf32, #tpu.memory_space<vmem>>, vector<1x32x256xf32>
    %31 = vector.shape_cast %30 : vector<1x32x256xf32> to vector<32x256xf32>
    %32 = vector.shape_cast %4 : vector<32x256xf32> to vector<1x32x256xf32>
    tpu.vector_store %arg7[%c0_17, %c0_18, %c0_19], %32 {strides = array<i32>} : memref<1x32x256xf32, #tpu.memory_space<vmem>>, vector<1x32x256xf32>,
    return
  }
  func.func @transform_0(%arg0: i32, %arg1: i32) -> (i32, i32) {
    %c0_i32 = arith.constant 0 : i32
    %c0_i32_0 = arith.constant 0 : i32
    %c0_i32_1 = arith.constant 0 : i32
    return %c0_i32, %c0_i32_0 : i32, i32
  }
  func.func @transform_1(%arg0: i32, %arg1: i32) -> (i32, i32, i32) {
    %c0_i32 = arith.constant 0 : i32
    %c0_i32_0 = arith.constant 0 : i32
    return %arg1, %c0_i32, %arg0 : i32, i32, i32
  }
  func.func @transform_2(%arg0: i32, %arg1: i32) -> (i32, i32, i32) {
    %c0_i32 = arith.constant 0 : i32
    %c0_i32_0 = arith.constant 0 : i32
    %c0_i32_1 = arith.constant 0 : i32
    return %c0_i32, %c0_i32_0, %arg0 : i32, i32, i32
  }
  func.func @transform_3(%arg0: i32, %arg1: i32) -> (i32, i32) {
    %c0_i32 = arith.constant 0 : i32
    %c0_i32_0 = arith.constant 0 : i32
    %c0_i32_1 = arith.constant 0 : i32
    return %c0_i32, %c0_i32_0 : i32, i32
  }
  func.func @transform_4(%arg0: i32, %arg1: i32) -> (i32, i32, i32) {
    %c0_i32 = arith.constant 0 : i32
    %c0_i32_0 = arith.constant 0 : i32
    return %arg1, %c0_i32, %arg0 : i32, i32, i32
  }
  func.func @transform_5(%arg0: i32, %arg1: i32) -> (i32, i32, i32) {
    %c0_i32 = arith.constant 0 : i32
    %c0_i32_0 = arith.constant 0 : i32
    return %arg1, %c0_i32, %arg0 : i32, i32, i32
  }
}

</mosaic_0001>

<llo_original>
// kernel: meta_embedding_forward.1
$region0: #{meta_embedding_forward.1}
  #allocation0 [shape = 'u32[]', space=smem, size = 0x4, offset = 0x4, fixed_abs, tag = 'smem constant byte address 0x4 - core index']
  #allocation1 [shape = 'u32[144,128]{1,0:T(1,128)}', space=vmem, size = 0x12000, scoped, tag = 'internal scratch']
  %s0 = inlined_call_operand.vmem [shape: f32[2,3], index: 0, kind: input, shape index: {}]
  %s1 = inlined_call_operand.vmem [shape: f32[2,32,256], index: 1, kind: input, shape index: {}]
  %s2 = inlined_call_operand.vmem [shape: f32[3,32,256], index: 2, kind: input, shape index: {}]
  %s3 = inlined_call_operand.vmem [shape: f32[32,32], index: 3, kind: input, shape index: {}]
  %s4 = inlined_call_operand.vmem [shape: f32[2,32,256], index: 4, kind: output, shape index: {0}]
  %s5 = inlined_call_operand.vmem [shape: f32[2,32,256], index: 5, kind: output, shape index: {1}]
  %6 = xla_tuple %s4, %s5
  %s7 = sld [smem:[#allocation0]]
  $region61: #{meta_embedding_forward.1} parent=0
    _
  %s9 = ssub.s32 1, %s7
  %s10 = scalar_select 0, %s9, %s7
  $region1: #{meta_embedding_forward.1} parent=0
    #allocation2 [shape = 'u8[1024]{0}', space=smem, size = 0x400, scoped, tag = 'input window, operand 0, single buffered']
    #allocation3 [shape = 's32[2]{0}', space=sflag, size = 0x8, scoped, tag = 'scoped memory for meta_embedding_forward.1']
    %11 = vsyncpa [#allocation3], 0
    loop: start=0, step=1, limit=4
    $region2: #{meta_embedding_forward.1} parent=1 // loop_pre_header
      _
    $region3: #{meta_embedding_forward.1} parent=1 // loop_header
      %s13 = sphi 0, %s17
      %p14 = scmp.ge.s32.totalorder %s13, 4
      %s20 = sphi 0, %s32
      %s21 = sphi 0, %s28
      %s22 = sphi 0, %s20
      %s23 = sphi 0, %s21
      %s24 = sphi 0, %s22
      %s25 = sphi 0, %s23
      %s33 = sphi 0, %s33
      %s35 = sphi 0, %s33
      %s36 = sphi 0, %s35
      %s50 = sphi 0, %s36
      %s58 = sphi 0, %s60
      %s61 = sphi 0, %s58
      %s62 = sphi 0, %s61
      %s78 = sphi 0, %s62
      %s84 = sphi 0, %s86
      %s87 = sphi 0, %s84
      %s88 = sphi 0, %s87
      %s104 = sphi 0, %s88
      %s108 = sphi 0, %s108
      %s110 = sphi 0, %s108
      %s111 = sphi 0, %s110
      %s125 = sphi 0, %s111
      %s133 = sphi 0, %s135
      %s136 = sphi 0, %s133
      %s137 = sphi 0, %s136
      %s153 = sphi 0, %s137
      %s161 = sphi 0, %s163
      %s164 = sphi 0, %s161
      %s165 = sphi 0, %s164
      %s181 = sphi 0, %s165
    $region4: #{meta_embedding_forward.1} parent=1 // loop_header_branch
      %16 = sbr.rel (%p14) target = $region8
    $region5: #{meta_embedding_forward.1} parent=1 // loop_body
      %s18 = ssub.s32 %s13, 1
      %s19 = ssub.s32 %s13, 2
      %s26 = sadd.s32 1, %s21
      %p27 = scmp.ge.s32.totalorder %s26, 2
      %s28 = scalar_select %p27, 0, %s26
      %s29 = sadd.s32 1, %s20
      %s30 = scalar_select %p27, %s29, %s20
      %p31 = scmp.ge.s32.totalorder %s30, 1
      %s32 = scalar_select %p31, 0, %s30
      %s34 = sadd.s32 %s33, 1
      %p37 = scmp.eq.s32.totalorder %s13, 1
      %p38 = scmp.ne.s32.totalorder %s33, %s35
      %p39 = scmp.eq.s32.totalorder %s13, 0
      %p40 = por %p38, %p39
      %p41 = scmp.ne.s32.totalorder %s33, %s35
      %p42 = scmp.eq.s32.totalorder %s18, 1
      %p43 = por %p41, %p42
      %p44 = scmp.ne.s32.totalorder %s35, %s36
      %p45 = scmp.eq.s32.totalorder %s18, 0
      %p46 = por %p44, %p45
      %p47 = scmp.ne.s32.totalorder %s35, %s36
      %p48 = scmp.eq.s32.totalorder %s19, 1
      %p49 = por %p47, %p48
      %p51 = scmp.ne.s32.totalorder %s36, %s50
      %p52 = scmp.eq.s32.totalorder %s19, 0
      %p53 = por %p51, %p52
      %s54 = ssub.s32 %s21, %s28
      %s55 = ssub.s32 %s20, %s32
      %s56 = sor.u32 %s54, %s55
      %p57 = scmp.eq.s32.totalorder %s56, 0
      %s59 = sadd.s32 %s58, 1
      %s60 = scalar_select %p57, %s58, %s59
      %p63 = pneg %p57
      %p64 = scmp.eq.s32.totalorder %s13, 1
      %p65 = por %p63, %p64
      %p66 = scmp.ne.s32.totalorder %s58, %s61
      %p67 = scmp.eq.s32.totalorder %s13, 0
      %p68 = por %p66, %p67
      %p69 = scmp.ne.s32.totalorder %s58, %s61
      %p70 = scmp.eq.s32.totalorder %s18, 1
      %p71 = por %p69, %p70
      %p72 = scmp.ne.s32.totalorder %s61, %s62
      %p73 = scmp.eq.s32.totalorder %s18, 0
      %p74 = por %p72, %p73
      %p75 = scmp.ne.s32.totalorder %s61, %s62
      %p76 = scmp.eq.s32.totalorder %s19, 1
      %p77 = por %p75, %p76
      %p79 = scmp.ne.s32.totalorder %s62, %s78
      %p80 = scmp.eq.s32.totalorder %s19, 0
      %p81 = por %p79, %p80
      %s82 = ssub.s32 %s20, %s32
      %p83 = scmp.eq.s32.totalorder %s82, 0
      %s85 = sadd.s32 %s84, 1
      %s86 = scalar_select %p83, %s84, %s85
      %p89 = pneg %p83
      %p90 = scmp.eq.s32.totalorder %s13, 1
      %p91 = por %p89, %p90
      %p92 = scmp.ne.s32.totalorder %s84, %s87
      %p93 = scmp.eq.s32.totalorder %s13, 0
      %p94 = por %p92, %p93
      %p95 = scmp.ne.s32.totalorder %s84, %s87
      %p96 = scmp.eq.s32.totalorder %s18, 1
      %p97 = por %p95, %p96
      %p98 = scmp.ne.s32.totalorder %s87, %s88
      %p99 = scmp.eq.s32.totalorder %s18, 0
      %p100 = por %p98, %p99
      %p101 = scmp.ne.s32.totalorder %s87, %s88
      %p102 = scmp.eq.s32.totalorder %s19, 1
      %p103 = por %p101, %p102
      %p105 = scmp.ne.s32.totalorder %s88, %s104
      %p106 = scmp.eq.s32.totalorder %s19, 0
      %p107 = por %p105, %p106
      %s109 = sadd.s32 %s108, 1
      %p112 = scmp.eq.s32.totalorder %s13, 1
      %p113 = scmp.ne.s32.totalorder %s108, %s110
      %p114 = scmp.eq.s32.totalorder %s13, 0
      %p115 = por %p113, %p114
      %p116 = scmp.ne.s32.totalorder %s108, %s110
      %p117 = scmp.eq.s32.totalorder %s18, 1
      %p118 = por %p116, %p117
      %p119 = scmp.ne.s32.totalorder %s110, %s111
      %p120 = scmp.eq.s32.totalorder %s18, 0
      %p121 = por %p119, %p120
      %p122 = scmp.ne.s32.totalorder %s110, %s111
      %p123 = scmp.eq.s32.totalorder %s19, 1
      %p124 = por %p122, %p123
      %p126 = scmp.ne.s32.totalorder %s111, %s125
      %p127 = scmp.eq.s32.totalorder %s19, 0
      %p128 = por %p126, %p127
      %s129 = ssub.s32 %s21, %s28
      %s130 = ssub.s32 %s20, %s32
      %s131 = sor.u32 %s129, %s130
      %p132 = scmp.eq.s32.totalorder %s131, 0
      %s134 = sadd.s32 %s133, 1
      %s135 = scalar_select %p132, %s133, %s134
      %p138 = pneg %p132
      %p139 = scmp.eq.s32.totalorder %s13, 1
      %p140 = por %p138, %p139
      %p141 = scmp.ne.s32.totalorder %s133, %s136
      %p142 = scmp.eq.s32.totalorder %s13, 0
      %p143 = por %p141, %p142
      %p144 = scmp.ne.s32.totalorder %s133, %s136
      %p145 = scmp.eq.s32.totalorder %s18, 1
      %p146 = por %p144, %p145
      %p147 = scmp.ne.s32.totalorder %s136, %s137
      %p148 = scmp.eq.s32.totalorder %s18, 0
      %p149 = por %p147, %p148
      %p150 = scmp.ne.s32.totalorder %s136, %s137
      %p151 = scmp.eq.s32.totalorder %s19, 1
      %p152 = por %p150, %p151
      %p154 = scmp.ne.s32.totalorder %s137, %s153
      %p155 = scmp.eq.s32.totalorder %s19, 0
      %p156 = por %p154, %p155
      %s157 = ssub.s32 %s21, %s28
      %s158 = ssub.s32 %s20, %s32
      %s159 = sor.u32 %s157, %s158
      %p160 = scmp.eq.s32.totalorder %s159, 0
      %s162 = sadd.s32 %s161, 1
      %s163 = scalar_select %p160, %s161, %s162
      %p166 = pneg %p160
      %p167 = scmp.eq.s32.totalorder %s13, 1
      %p168 = por %p166, %p167
      %p169 = scmp.ne.s32.totalorder %s161, %s164
      %p170 = scmp.eq.s32.totalorder %s13, 0
      %p171 = por %p169, %p170
      %p172 = scmp.ne.s32.totalorder %s161, %s164
      %p173 = scmp.eq.s32.totalorder %s18, 1
      %p174 = por %p172, %p173
      %p175 = scmp.ne.s32.totalorder %s164, %s165
      %p176 = scmp.eq.s32.totalorder %s18, 0
      %p177 = por %p175, %p176
      %p178 = scmp.ne.s32.totalorder %s164, %s165
      %p179 = scmp.eq.s32.totalorder %s19, 1
      %p180 = por %p178, %p179
      %p182 = scmp.ne.s32.totalorder %s165, %s181
      %p183 = scmp.eq.s32.totalorder %s19, 0
      %p184 = por %p182, %p183
      %p185 = scmp.le.s32.totalorder 1, %s13
      %p186 = scmp.lt.s32.totalorder %s13, 3
      %p187 = pnand %p185, %p186
      %p188 = pneg %p187
      // Predicated region
      $region9: #{meta_embedding_forward.1} parent=5 // pred_check
        _
      $region10: #{meta_embedding_forward.1} parent=5 // pred_check_branch
        %190 = sbr.rel (%p187) target = $region12
      $region11: #{meta_embedding_forward.1} parent=5 // pred_region
        %s191 = ssub.s32 %s13, 1
        // Predicated region
        $region13: #{meta_embedding_forward.1} parent=11 // pred_check
          %p192 = pneg %p46
        $region14: #{meta_embedding_forward.1} parent=11 // pred_check_branch
          %194 = sbr.rel (%p192) target = $region16
        $region15: #{meta_embedding_forward.1} parent=11 // pred_region
          %s196 = ssub.s32 32, 32
          %197 = vsyncadd [#allocation3], %s196
          %s199 = sshll.u32 %s0, 4
          %s200 = int_to_ptr.vmem [resolvable:$true] %s199
          %202 = dma.vmem_to_smem %s200, 32, [#allocation2], [#allocation3]
        $region16: #{meta_embedding_forward.1} parent=11 // pred_fallthru
          _
        // Predicated region
        $region17: #{meta_embedding_forward.1} parent=11 // pred_check
          %p203 = pneg %p100
        $region18: #{meta_embedding_forward.1} parent=11 // pred_check_branch
          %205 = sbr.rel (%p203) target = $region20
        $region19: #{meta_embedding_forward.1} parent=11 // pred_region
          %s206 = smul.u32 2, %s22
          %p207 = scmp.lt.s32.totalorder %s206, 1
          %s208 = scalar_select %p207, %s206, 1
          %s209 = smul.addr %s208, 8
          %s210 = scalar_lea.vmem %s2, %s209
          %s211 = smul.u32 2, %s22
        $region20: #{meta_embedding_forward.1} parent=11 // pred_fallthru
          _
        // Predicated region
        $region21: #{meta_embedding_forward.1} parent=11 // pred_check
          %p212 = pneg %p121
        $region22: #{meta_embedding_forward.1} parent=11 // pred_check_branch
          %214 = sbr.rel (%p212) target = $region24
        $region23: #{meta_embedding_forward.1} parent=11 // pred_region
          _
        $region24: #{meta_embedding_forward.1} parent=11 // pred_fallthru
          _
      $region12: #{meta_embedding_forward.1} parent=5 // pred_fallthru
        _
      %p215 = scmp.lt.s32.totalorder %s13, 2
      // Predicated region
      $region25: #{meta_embedding_forward.1} parent=5 // pred_check
        %p216 = pneg %p215
      $region26: #{meta_embedding_forward.1} parent=5 // pred_check_branch
        %218 = sbr.rel (%p216) target = $region28
      $region27: #{meta_embedding_forward.1} parent=5 // pred_region
        // Predicated region
        $region29: #{meta_embedding_forward.1} parent=27 // pred_check
          %p219 = pneg %p68
        $region30: #{meta_embedding_forward.1} parent=27 // pred_check_branch
          %221 = sbr.rel (%p219) target = $region32
        $region31: #{meta_embedding_forward.1} parent=27 // pred_region
          %s222 = smul.u32 2, %s20
          %p223 = scmp.lt.s32.totalorder %s21, 1
          %s224 = scalar_select %p223, %s21, 1
          %p225 = scmp.lt.s32.totalorder %s222, 1
          %s226 = scalar_select %p225, %s222, 1
          %s227 = smul.addr %s224, 8
          %s228 = sadd.s32 %s226, %s227
          %s229 = smul.addr %s228, 8
          %s230 = scalar_lea.vmem %s1, %s229
          %s231 = smul.u32 2, %s20
        $region32: #{meta_embedding_forward.1} parent=27 // pred_fallthru
          _
      $region28: #{meta_embedding_forward.1} parent=5 // pred_fallthru
        _
      %p232 = scmp.le.s32.totalorder 1, %s13
      %p233 = scmp.lt.s32.totalorder %s13, 3
      %p234 = pnand %p232, %p233
      %p235 = pneg %p234
      // Predicated region
      $region33: #{meta_embedding_forward.1} parent=5 // pred_check
        _
      $region34: #{meta_embedding_forward.1} parent=5 // pred_check_branch
        %237 = sbr.rel (%p234) target = $region36
      $region35: #{meta_embedding_forward.1} parent=5 // pred_region
        %s238 = ssub.s32 %s13, 1
        // Predicated region
        $region37: #{meta_embedding_forward.1} parent=35 // pred_check
          %p239 = pneg %p46
        $region38: #{meta_embedding_forward.1} parent=35 // pred_check_branch
          %241 = sbr.rel (%p239) target = $region40
        $region39: #{meta_embedding_forward.1} parent=35 // pred_region
          %242 = dma.done [#allocation3], 32
        $region40: #{meta_embedding_forward.1} parent=35 // pred_fallthru
          _
        %243 = sfence
        %p244 = pneg %p46
        %p245 = pneg %p43
        %s246 = smul.u32 2, %s22
        %p247 = scmp.lt.s32.totalorder %s23, 1
        %s248 = scalar_select %p247, %s23, 1
        %p249 = scmp.lt.s32.totalorder %s246, 1
        %s250 = scalar_select %p249, %s246, 1
        %s251 = smul.addr %s248, 8
        %s252 = sadd.s32 %s250, %s251
        %s253 = smul.addr %s252, 8
        %s254 = scalar_lea.vmem %s1, %s253
        %p255 = pneg %p74
        %p256 = pneg %p71
        %s257 = smul.u32 2, %s22
        %p258 = scmp.lt.s32.totalorder %s257, 1
        %s259 = scalar_select %p258, %s257, 1
        %s260 = smul.addr %s259, 8
        %s261 = scalar_lea.vmem %s2, %s260
        %p262 = pneg %p100
        %p263 = pneg %p97
        %p264 = pneg %p121
        %p265 = pneg %p118
        %p266 = pneg %p149
        %p267 = pneg %p146
        %s268 = smul.u32 2, %s22
        %p269 = scmp.lt.s32.totalorder %s23, 1
        %s270 = scalar_select %p269, %s23, 1
        %p271 = scmp.lt.s32.totalorder %s268, 1
        %s272 = scalar_select %p271, %s268, 1
        %s273 = smul.addr %s270, 8
        %s274 = sadd.s32 %s272, %s273
        %s275 = smul.addr %s274, 8
        %s276 = scalar_lea.vmem %s4, %s275
        %p277 = pneg %p177
        %p278 = pneg %p174
        %s279 = smul.u32 2, %s22
        %p280 = scmp.lt.s32.totalorder %s23, 1
        %s281 = scalar_select %p280, %s23, 1
        %p282 = scmp.lt.s32.totalorder %s279, 1
        %s283 = scalar_select %p282, %s279, 1
        %s284 = smul.addr %s281, 8
        %s285 = sadd.s32 %s283, %s284
        %s286 = smul.addr %s285, 8
        %s287 = scalar_lea.vmem %s5, %s286
        %s288 = smul.u32 2, %s22
        %p289 = scmp.lt.s32.totalorder %s23, 1
        %s290 = scalar_select %p289, %s23, 1
        %p291 = scmp.lt.s32.totalorder %s288, 1
        %s292 = scalar_select %p291, %s288, 1
        %s293 = smul.addr %s290, 8
        %s294 = sadd.s32 %s292, %s293
        %s295 = smul.addr %s294, 8
        %s296 = scalar_lea.vmem %s1, %s295
        %s297 = smul.u32 2, %s22
        %s298 = smul.u32 2, %s22
        %p299 = scmp.lt.s32.totalorder %s298, 1
        %s300 = scalar_select %p299, %s298, 1
        %s301 = smul.addr %s300, 8
        %s302 = scalar_lea.vmem %s2, %s301
        %s303 = smul.u32 2, %s22
        %s304 = smul.u32 2, %s22
        %p305 = scmp.lt.s32.totalorder %s23, 1
        %s306 = scalar_select %p305, %s23, 1
        %p307 = scmp.lt.s32.totalorder %s304, 1
        %s308 = scalar_select %p307, %s304, 1
        %s309 = smul.addr %s306, 8
        %s310 = sadd.s32 %s308, %s309
        %s311 = smul.addr %s310, 8
        %s312 = scalar_lea.vmem %s4, %s311
        %s313 = smul.u32 2, %s22
        %s314 = smul.u32 2, %s22
        %p315 = scmp.lt.s32.totalorder %s23, 1
        %s316 = scalar_select %p315, %s23, 1
        %p317 = scmp.lt.s32.totalorder %s314, 1
        %s318 = scalar_select %p317, %s314, 1
        %s319 = smul.addr %s316, 8
        %s320 = sadd.s32 %s318, %s319
        %s321 = smul.addr %s320, 8
        %s322 = scalar_lea.vmem %s5, %s321
        %s323 = smul.u32 2, %s22
        %v324 = vld [vmem:[%s296] sm:$0xff]
        %v325 = vld [vmem:[%s296 + $0x8] sm:$0xff]
        %v326 = vld [vmem:[%s296 + $0x10] sm:$0xff]
        %v327 = vld [vmem:[%s296 + $0x18] sm:$0xff]
        %v328 = vld [vmem:[%s296 + $0x20] sm:$0xff]
        %v329 = vld [vmem:[%s296 + $0x28] sm:$0xff]
        %v330 = vld [vmem:[%s296 + $0x30] sm:$0xff]
        %v331 = vld [vmem:[%s296 + $0x38] sm:$0xff]
        %v332 = vld [vmem:[%s3] sm:$0xff]
        %v333 = vld [vmem:[%s3 + $0x8] sm:$0xff]
        %v334 = vld [vmem:[%s3 + $0x10] sm:$0xff]
        %v335 = vld [vmem:[%s3 + $0x18] sm:$0xff]
        %vm336 = vcmask 261120
        %v338 = vsel %vm336, %v332, 0
        %v341 = vsel %vm336, %v333, 0
        %v344 = vsel %vm336, %v334, 0
        %v347 = vsel %vm336, %v335, 0
        %349 = vmatprep.subr.mxu0 %v325
        %350 = vmatpush1.msra.mxu0 %v324
        %351 = vmatprep.subr.mxu0 %v327
        %352 = vmatpush1.msra.mxu0 %v326
        %353 = vmatprep.subr.mxu0 %v329
        %354 = vmatpush1.msra.mxu0 %v328
        %355 = vmatprep.subr.mxu0 %v331
        %356 = vmatpush1.msra.mxu0 %v330
        %357 = vmatprep.subr.mxu0 0.0
        %358 = vmatpush1.msra.mxu0 0.0
        %359 = vmatprep.subr.mxu0 0.0
        %360 = vmatpush1.msra.mxu0 0.0
        %361 = vmatprep.subr.mxu0 0.0
        %362 = vmatpush1.msra.mxu0 0.0
        %363 = vmatprep.subr.mxu0 0.0
        %364 = vmatpush1.msra.mxu0 0.0
        %365 = vmatprep.subr.mxu0 0.0
        %366 = vmatpush1.msra.mxu0 0.0
        %367 = vmatprep.subr.mxu0 0.0
        %368 = vmatpush1.msra.mxu0 0.0
        %369 = vmatprep.subr.mxu0 0.0
        %370 = vmatpush1.msra.mxu0 0.0
        %371 = vmatprep.subr.mxu0 0.0
        %372 = vmatpush1.msra.mxu0 0.0
        %373 = vmatprep.subr.mxu0 0.0
        %374 = vmatpush1.msra.mxu0 0.0
        %375 = vmatprep.subr.mxu0 0.0
        %376 = vmatpush1.msra.mxu0 0.0
        %377 = vmatprep.subr.mxu0 0.0
        %378 = vmatpush1.msra.mxu0 0.0
        %379 = vmatprep.subr.mxu0 0.0
        %380 = vmatpush1.msra.mxu0 0.0
        %381 = vmatprep.subr.mxu0 0.0
        %382 = vmatpush1.msra.mxu0 0.0
        %383 = vmatprep.subr.mxu0 0.0
        %384 = vmatpush1.msra.mxu0 0.0
        %385 = vmatprep.subr.mxu0 0.0
        %386 = vmatpush1.msra.mxu0 0.0
        %387 = vmatprep.subr.mxu0 0.0
        %388 = vmatpush1.msra.mxu0 0.0
        %389 = vmatprep.subr.mxu0 0.0
        %390 = vmatpush1.msra.mxu0 0.0
        %391 = vmatprep.subr.mxu0 0.0
        %392 = vmatpush1.msra.mxu0 0.0
        %393 = vmatprep.subr.mxu0 0.0
        %394 = vmatpush1.msra.mxu0 0.0
        %395 = vmatprep.subr.mxu0 0.0
        %396 = vmatpush1.msra.mxu0 0.0
        %397 = vmatprep.subr.mxu0 0.0
        %398 = vmatpush1.msra.mxu0 0.0
        %399 = vmatprep.subr.mxu0 0.0
        %400 = vmatpush1.msra.mxu0 0.0
        %401 = vmatprep.subr.mxu0 0.0
        %402 = vmatpush1.msra.mxu0 0.0
        %403 = vmatprep.subr.mxu0 0.0
        %404 = vmatpush1.msra.mxu0 0.0
        %405 = vmatprep.subr.mxu0 0.0
        %406 = vmatpush1.msra.mxu0 0.0
        %407 = vmatprep.subr.mxu0 0.0
        %408 = vmatpush1.msra.mxu0 0.0
        %409 = vmatprep.subr.mxu0 0.0
        %410 = vmatpush1.msra.mxu0 0.0
        %411 = vmatprep.subr.mxu0 0.0
        %412 = vmatpush1.msra.mxu0 0.0
        %413 = vmatprep.mubr.f32.mxu0 0.0
        %414 = vmatmul.mubr.f32.gmra.mrb[0].mxu0 %v338
        %v415 = vpop.f32.mrb[0].mxu0
        %v416 = vadd.f32 0.0, %v415
        %v417 = vpop.f32.mrb[0].mxu0
        %v418 = vadd.f32 0.0, %v417
        %419 = vmatprep.mubr.f32.mxu0 0.0
        %420 = vmatmul.mubr.f32.gmra.mrb[0].mxu0 %v341
        %v421 = vpop.f32.mrb[0].mxu0
        %v422 = vadd.f32 0.0, %v421
        %v423 = vpop.f32.mrb[0].mxu0
        %v424 = vadd.f32 0.0, %v423
        %425 = vmatprep.mubr.f32.mxu0 0.0
        %426 = vmatmul.mubr.f32.gmra.mrb[0].mxu0 %v344
        %v427 = vpop.f32.mrb[0].mxu0
        %v428 = vadd.f32 0.0, %v427
        %v429 = vpop.f32.mrb[0].mxu0
        %v430 = vadd.f32 0.0, %v429
        %431 = vmatprep.mubr.f32.mxu0 0.0
        %432 = vmatmul.mubr.f32.gmra.mrb[0].mxu0 %v347
        %v433 = vpop.f32.mrb[0].mxu0
        %v434 = vadd.f32 0.0, %v433
        %v435 = vpop.f32.mrb[0].mxu0
        %v436 = vadd.f32 0.0, %v435
        %437 = vdwg.mxu0
        %v438 = vtanh.pop %v416
        %v439 = vtanh.pop %v418
        %v440 = vtanh.pop %v422
        %v441 = vtanh.pop %v424
        %v442 = vtanh.pop %v428
        %v443 = vtanh.pop %v430
        %v444 = vtanh.pop %v434
        %v445 = vtanh.pop %v436
        %s446 = smul.u32 %s23, 128
        %s447 = sld [smem:[#allocation2 + %s446]]
        %v448 = vld [vmem:[%s302] sm:$0xff]
        %v449 = vld [vmem:[%s302 + $0x8] sm:$0xff]
        %v450 = vld [vmem:[%s302 + $0x10] sm:$0xff]
        %v451 = vld [vmem:[%s302 + $0x18] sm:$0xff]
        %v452 = vld [vmem:[%s302 + $0x20] sm:$0xff]
        %v453 = vld [vmem:[%s302 + $0x28] sm:$0xff]
        %v454 = vld [vmem:[%s302 + $0x30] sm:$0xff]
        %v455 = vld [vmem:[%s302 + $0x38] sm:$0xff]
        %v456 = vstv %s447
        %v457 = vmul.f32 %v456, %v448
        %v458 = vmul.f32 %v456, %v449
        %v459 = vmul.f32 %v456, %v450
        %v460 = vmul.f32 %v456, %v451
        %v461 = vmul.f32 %v456, %v452
        %v462 = vmul.f32 %v456, %v453
        %v463 = vmul.f32 %v456, %v454
        %v464 = vmul.f32 %v456, %v455
        %s465 = sadd.s32 %s446, 1
        %s466 = sld [smem:[#allocation2 + %s465]]
        %s467 = scalar_lea.vmem %s302, 64
        %v468 = vld [vmem:[%s467] sm:$0xff]
        %v469 = vld [vmem:[%s467 + $0x8] sm:$0xff]
        %v470 = vld [vmem:[%s467 + $0x10] sm:$0xff]
        %v471 = vld [vmem:[%s467 + $0x18] sm:$0xff]
        %v472 = vld [vmem:[%s467 + $0x20] sm:$0xff]
        %v473 = vld [vmem:[%s467 + $0x28] sm:$0xff]
        %v474 = vld [vmem:[%s467 + $0x30] sm:$0xff]
        %v475 = vld [vmem:[%s467 + $0x38] sm:$0xff]
        %v476 = vstv %s466
        %v477 = vmul.f32 %v476, %v468
        %v478 = vmul.f32 %v476, %v469
        %v479 = vmul.f32 %v476, %v470
        %v480 = vmul.f32 %v476, %v471
        %v481 = vmul.f32 %v476, %v472
        %v482 = vmul.f32 %v476, %v473
        %v483 = vmul.f32 %v476, %v474
        %v484 = vmul.f32 %v476, %v475
        %v485 = vadd.f32 %v457, %v477
        %v486 = vadd.f32 %v458, %v478
        %v487 = vadd.f32 %v459, %v479
        %v488 = vadd.f32 %v460, %v480
        %v489 = vadd.f32 %v461, %v481
        %v490 = vadd.f32 %v462, %v482
        %v491 = vadd.f32 %v463, %v483
        %v492 = vadd.f32 %v464, %v484
        %s493 = sadd.s32 %s446, 2
        %s494 = sld [smem:[#allocation2 + %s493]]
        %s495 = scalar_lea.vmem %s302, 128
        %v496 = vld [vmem:[%s495] sm:$0xff]
        %v497 = vld [vmem:[%s495 + $0x8] sm:$0xff]
        %v498 = vld [vmem:[%s495 + $0x10] sm:$0xff]
        %v499 = vld [vmem:[%s495 + $0x18] sm:$0xff]
        %v500 = vld [vmem:[%s495 + $0x20] sm:$0xff]
        %v501 = vld [vmem:[%s495 + $0x28] sm:$0xff]
        %v502 = vld [vmem:[%s495 + $0x30] sm:$0xff]
        %v503 = vld [vmem:[%s495 + $0x38] sm:$0xff]
        %v504 = vstv %s494
        %v505 = vmul.f32 %v504, %v496
        %v506 = vmul.f32 %v504, %v497
        %v507 = vmul.f32 %v504, %v498
        %v508 = vmul.f32 %v504, %v499
        %v509 = vmul.f32 %v504, %v500
        %v510 = vmul.f32 %v504, %v501
        %v511 = vmul.f32 %v504, %v502
        %v512 = vmul.f32 %v504, %v503
        %v513 = vadd.f32 %v485, %v505
        %v514 = vadd.f32 %v486, %v506
        %v515 = vadd.f32 %v487, %v507
        %v516 = vadd.f32 %v488, %v508
        %v517 = vadd.f32 %v489, %v509
        %v518 = vadd.f32 %v490, %v510
        %v519 = vadd.f32 %v491, %v511
        %v520 = vadd.f32 %v492, %v512
        %v521 = vmul.f32 %v513, %v438
        %v522 = vmul.f32 %v514, %v439
        %v523 = vmul.f32 %v515, %v440
        %v524 = vmul.f32 %v516, %v441
        %v525 = vmul.f32 %v517, %v442
        %v526 = vmul.f32 %v518, %v443
        %v527 = vmul.f32 %v519, %v444
        %v528 = vmul.f32 %v520, %v445
        %v529 = vadd.f32 %v324, %v521
        %v530 = vadd.f32 %v325, %v522
        %v531 = vadd.f32 %v326, %v523
        %v532 = vadd.f32 %v327, %v524
        %v533 = vadd.f32 %v328, %v525
        %v534 = vadd.f32 %v329, %v526
        %v535 = vadd.f32 %v330, %v527
        %v536 = vadd.f32 %v331, %v528
        %537 = vst [vmem:[%s312] sm:$0xff] %v529
        %538 = vst [vmem:[%s312 + $0x8] sm:$0xff] %v530
        %539 = vst [vmem:[%s312 + $0x10] sm:$0xff] %v531
        %540 = vst [vmem:[%s312 + $0x18] sm:$0xff] %v532
        %541 = vst [vmem:[%s312 + $0x20] sm:$0xff] %v533
        %542 = vst [vmem:[%s312 + $0x28] sm:$0xff] %v534
        %543 = vst [vmem:[%s312 + $0x30] sm:$0xff] %v535
        %544 = vst [vmem:[%s312 + $0x38] sm:$0xff] %v536
        %545 = vst [vmem:[%s322] sm:$0xff] %v438
        %546 = vst [vmem:[%s322 + $0x8] sm:$0xff] %v439
        %547 = vst [vmem:[%s322 + $0x10] sm:$0xff] %v440
        %548 = vst [vmem:[%s322 + $0x18] sm:$0xff] %v441
        %549 = vst [vmem:[%s322 + $0x20] sm:$0xff] %v442
        %550 = vst [vmem:[%s322 + $0x28] sm:$0xff] %v443
        %551 = vst [vmem:[%s322 + $0x30] sm:$0xff] %v444
        %552 = vst [vmem:[%s322 + $0x38] sm:$0xff] %v445
        %s553 = smul.u32 2, %s22
        %p554 = scmp.lt.s32.totalorder %s23, 1
        %s555 = scalar_select %p554, %s23, 1
        %p556 = scmp.lt.s32.totalorder %s553, 1
        %s557 = scalar_select %p556, %s553, 1
        %s558 = smul.addr %s555, 8
        %s559 = sadd.s32 %s557, %s558
        %s560 = smul.addr %s559, 8
        %s561 = scalar_lea.vmem %s4, %s560
        %s562 = smul.u32 2, %s22
        %p563 = scmp.lt.s32.totalorder %s23, 1
        %s564 = scalar_select %p563, %s23, 1
        %p565 = scmp.lt.s32.totalorder %s562, 1
        %s566 = scalar_select %p565, %s562, 1
        %s567 = smul.addr %s564, 8
        %s568 = sadd.s32 %s566, %s567
        %s569 = smul.addr %s568, 8
        %s570 = scalar_lea.vmem %s5, %s569
        // Predicated region
        $region41: #{meta_embedding_forward.1} parent=35 // pred_check
          %p571 = pneg %p146
        $region42: #{meta_embedding_forward.1} parent=35 // pred_check_branch
          %573 = sbr.rel (%p571) target = $region44
        $region43: #{meta_embedding_forward.1} parent=35 // pred_region
          %s574 = smul.u32 2, %s22
        $region44: #{meta_embedding_forward.1} parent=35 // pred_fallthru
          _
        // Predicated region
        $region45: #{meta_embedding_forward.1} parent=35 // pred_check
          %p575 = pneg %p174
        $region46: #{meta_embedding_forward.1} parent=35 // pred_check_branch
          %577 = sbr.rel (%p575) target = $region48
        $region47: #{meta_embedding_forward.1} parent=35 // pred_region
          %s578 = smul.u32 2, %s22
        $region48: #{meta_embedding_forward.1} parent=35 // pred_fallthru
          _
      $region36: #{meta_embedding_forward.1} parent=5 // pred_fallthru
        _
      %p579 = scmp.le.s32.totalorder 2, %s13
      // Predicated region
      $region49: #{meta_embedding_forward.1} parent=5 // pred_check
        %p580 = pneg %p579
      $region50: #{meta_embedding_forward.1} parent=5 // pred_check_branch
        %582 = sbr.rel (%p580) target = $region52
      $region51: #{meta_embedding_forward.1} parent=5 // pred_region
        %s583 = ssub.s32 %s13, 2
        // Predicated region
        $region53: #{meta_embedding_forward.1} parent=51 // pred_check
          %p584 = pneg %p152
        $region54: #{meta_embedding_forward.1} parent=51 // pred_check_branch
          %586 = sbr.rel (%p584) target = $region56
        $region55: #{meta_embedding_forward.1} parent=51 // pred_region
          %s587 = smul.u32 2, %s24
          %p588 = scmp.lt.s32.totalorder %s25, 1
          %s589 = scalar_select %p588, %s25, 1
          %p590 = scmp.lt.s32.totalorder %s587, 1
          %s591 = scalar_select %p590, %s587, 1
          %s592 = smul.addr %s589, 8
          %s593 = sadd.s32 %s591, %s592
          %s594 = smul.addr %s593, 8
          %s595 = scalar_lea.vmem %s4, %s594
        $region56: #{meta_embedding_forward.1} parent=51 // pred_fallthru
          _
        // Predicated region
        $region57: #{meta_embedding_forward.1} parent=51 // pred_check
          %p596 = pneg %p180
        $region58: #{meta_embedding_forward.1} parent=51 // pred_check_branch
          %598 = sbr.rel (%p596) target = $region60
        $region59: #{meta_embedding_forward.1} parent=51 // pred_region
          %s599 = smul.u32 2, %s24
          %p600 = scmp.lt.s32.totalorder %s25, 1
          %s601 = scalar_select %p600, %s25, 1
          %p602 = scmp.lt.s32.totalorder %s599, 1
          %s603 = scalar_select %p602, %s599, 1
          %s604 = smul.addr %s601, 8
          %s605 = sadd.s32 %s603, %s604
          %s606 = smul.addr %s605, 8
          %s607 = scalar_lea.vmem %s5, %s606
        $region60: #{meta_embedding_forward.1} parent=51 // pred_fallthru
          _
      $region52: #{meta_embedding_forward.1} parent=5 // pred_fallthru
        _
    $region6: #{meta_embedding_forward.1} parent=1 // loop_footer
      %s17 = sadd.s32 1, %s13
    $region7: #{meta_embedding_forward.1} parent=1 // loop_footer_branch
      %12 = sbr.rel target = $region3
    $region8: #{meta_embedding_forward.1} parent=1 // loop_exit
      _
    %608 = vsyncpa [#allocation3], 1
    %s609 = scalar_lea.sflag [#allocation3], 1
    %610 = vsyncpa %s609, 1

</llo_original>
